<compile_context>
chip_gen: v6e
topology: v6e:2x2x1
jax: 0.10.0
libtpu: 0.0.40
codegen_flags: <defaults>
</compile_context>

<pallas_src>
import functools

import jax
import jax.numpy as jnp
from jax import lax
from jax.experimental import pallas as pl
from jax.experimental.pallas import tpu as pltpu


def _round_up(x, m):
    return ((x + m - 1) // m) * m


def _vmem_limit_bytes():
    """Generation-aware scoped-VMEM limit (v7x: 64 MiB/TC, v5e/v6e: 128 MiB)."""
    try:
        cap = getattr(pltpu.get_tpu_info(), "vmem_capacity_bytes", None)
    except Exception:
        cap = None
    if not cap:
        cap = 64 * 2 ** 20                    # conservative default (v7x per-TC)
    return int(max(16 * 2 ** 20, min(cap // 2, 64 * 2 ** 20)))


# -----------------------------------------------------------------------------
# Kernel A: classes on sublanes, spatial positions on lanes (NCHW / small-C 2D)
# -----------------------------------------------------------------------------
def _ls_sublane_kernel(x_ref, t_ref, out_ref, acc_ref, cls_ref, *,
                       confidence, smoothing, num_classes,
                       tile, rem, num_tiles, split, tps):
    g = pl.program_id(0)          # batch * hw-split groups ("parallel")
    j = pl.program_id(1)          # HW tiles within a group ("arbitrary")

    @pl.when(j == 0)
    def _():
        acc_ref[...] = jnp.zeros_like(acc_ref)
        # Hoisted class-index constant, reused by every HW tile of this group.
        cls_ref[...] = lax.broadcasted_iota(jnp.int32, cls_ref.shape, 0)

    x = x_ref[0].astype(jnp.float32)     # (C, T): classes on sublanes
    t = t_ref[0]                         # (1, T) int32 targets per position
    cls = cls_ref[...]                   # (C, T) class indices

    # log-softmax pieces over the class (sublane) axis.
    m = jnp.max(x, axis=0, keepdims=True)                              # (1, T)
    lse = jnp.log(jnp.sum(jnp.exp(x - m), axis=0, keepdims=True))      # (1, T)

    # Fused one-hot gather + mean(logprobs) (uses confidence + smoothing == 1):
    #   loss = (m + lse) - sum_c w_c * x_c
    #   w_c  = smoothing/C + confidence * onehot(c == target)
    w = jnp.where(cls == t,
                  confidence + smoothing / num_classes,
                  smoothing / num_classes)
    wx = jnp.sum(w * x, axis=0, keepdims=True)                         # (1, T)
    loss = (m + lse) - wx                                              # (1, T)

    if split > 1:
        t_idx = (g % split) * tps + j    # global HW-tile index of this step
    else:
        t_idx = j

    if rem < tile:
        # Only the last valid HW tile has out-of-range lanes to mask.
        @pl.when(t_idx < num_tiles - 1)
        def _():
            acc_ref[...] += loss

        @pl.when(t_idx == num_tiles - 1)
        def _():
            lane = lax.broadcasted_iota(jnp.int32, loss.shape, 1)
            acc_ref[...] += jnp.where(lane < rem, loss, 0.0)
    elif split * tps != num_tiles:
        # Dead tiles introduced by the parallel HW split: skip them.
        @pl.when(t_idx < num_tiles)
        def _():
            acc_ref[...] += loss
    else:
        acc_ref[...] += loss

    @pl.when(j == tps - 1)
    def _():
        # Tree-add the per-lane accumulator down to one lane-dense 128-wide
        # partial (pure VPU adds on 128-aligned slices); wrapper finishes.
        acc = acc_ref[...]                                  # (1, tile)
        part = acc[:, 0:128]
        for k in range(1, tile // 128):
            part = part + acc[:, k * 128:(k + 1) * 128]
        out_ref[...] = part.reshape(out_ref.shape)


def _total_loss_classes_on_sublanes(x, target, *, confidence, smoothing,
                                    tile_hw, x_buffer_count):
    if x.ndim > 2:
        b, c = x.shape[0], x.shape[1]
        x3 = x.reshape(b, c, -1)                        # (B, C, HW): free reshape
        tgt = target.reshape(b, 1, -1).astype(jnp.int32)
    else:
        # Small-C (N, C): one XLA transpose to put classes on sublanes.
        n, c = x.shape
        x3 = x.T.reshape(1, c, n)
        tgt = target.reshape(1, 1, n).astype(jnp.int32)

    bsz, c, hw = x3.shape
    esize = jnp.dtype(x3.dtype).itemsize
    vmem_limit = _vmem_limit_bytes()

    # VMEM bytes per lane-column of one tile: pipelined x blocks, f32 upcast,
    # ~4 (C,T) f32 temporaries, class-index scratch, double-buffered int32
    # target block (8-sublane padded), 8-sublane-padded f32 accumulator.
    per_lane = (x_buffer_count * c * esize
                + (c * 4 if esize < 4 else 0)
                + 4 * c * 4
                + c * 4
                + 2 * 8 * 4
                + 8 * 4)
    if tile_hw is None:
        budget = vmem_limit // 2
        tile_hw = (budget // per_lane) // 128 * 128
        tile_hw = min(tile_hw, 2048, _round_up(hw, 128))
    tile_hw = max(128, _round_up(tile_hw, 128))

    num_tiles = -(-hw // tile_hw)
    rem = hw - (num_tiles - 1) * tile_hw        # valid lanes in the last tile

    # Split the HW tiles over a second "parallel" grid entry when the batch
    # axis alone cannot feed both v7x TensorCores.
    split = 2 if (bsz == 1 and num_tiles >= 2) else 1
    tps = -(-num_tiles // split)                # tiles per split group

    if split > 1:
        def bmap(g, j):
            t = jnp.minimum((g % split) * tps + j, num_tiles - 1)
            return (g // split, 0, t)
    else:
        def bmap(g, j):
            return (g, 0, j)

    x_spec_kwargs = {}
    if x_buffer_count != 2:                     # e.g. Buffered(3) sweep on v7x
        x_spec_kwargs["pipeline_mode"] = pl.Buffered(x_buffer_count)

    kernel = functools.partial(
        _ls_sublane_kernel,
        confidence=float(confidence), smoothing=float(smoothing),
        num_classes=float(c), tile=tile_hw, rem=rem,
        num_tiles=num_tiles, split=split, tps=tps)

    n_elems = bsz * hw * c
    cost = pl.CostEstimate(
        flops=6 * n_elems,
        transcendentals=n_elems + bsz * hw,
        bytes_accessed=n_elems * esize + bsz * hw * 4 + bsz * split * 128 * 4)

    partials = pl.pallas_call(
        kernel,
        out_shape=jax.ShapeDtypeStruct((bsz * split, 1, 128), jnp.float32),
        grid_spec=pltpu.PrefetchScalarGridSpec(
            num_scalar_prefetch=0,
            grid=(bsz * split, tps),
            in_specs=[
                pl.BlockSpec((1, c, tile_hw), bmap, **x_spec_kwargs),
                pl.BlockSpec((1, 1, tile_hw), bmap),
            ],
            out_specs=pl.BlockSpec((1, 1, 128), lambda g, j: (g, 0, 0)),
            scratch_shapes=[pltpu.VMEM((1, tile_hw), jnp.float32),
                            pltpu.VMEM((c, tile_hw), jnp.int32)],
        ),
        compiler_params=pltpu.CompilerParams(
            dimension_semantics=("parallel", "arbitrary"),
            vmem_limit_bytes=vmem_limit),
        cost_estimate=cost,
    )(x3, tgt)

    total = jnp.sum(partials)
    return total, bsz * hw


# -----------------------------------------------------------------------------
# Kernel B: 2-D (N, C) with C >= 128 -- classes on lanes, no host transpose
# -----------------------------------------------------------------------------
def _ls_lane_kernel(x_ref, t_ref, out_ref, *, confidence, smoothing,
                    num_classes, tile_n, rem):
    i = pl.program_id(0)
    x = x_ref[...].astype(jnp.float32)    # (tile_n, C): classes on lanes
    t = t_ref[...]                        # (tile_n, 1) int32 targets

    m = jnp.max(x, axis=1, keepdims=True)
    lse = jnp.log(jnp.sum(jnp.exp(x - m), axis=1, keepdims=True))

    cls = lax.broadcasted_iota(jnp.int32, x.shape, 1)
    w = jnp.where(cls == t,
                  confidence + smoothing / num_classes,
                  smoothing / num_classes)
    wx = jnp.sum(w * x, axis=1, keepdims=True)
    loss = (m + lse) - wx                 # (tile_n, 1)

    if rem < tile_n:                      # mask garbage rows of the last tile
        limit = jnp.where(i == pl.num_programs(0) - 1, rem, tile_n)
        row = lax.broadcasted_iota(jnp.int32, loss.shape, 0)
        loss = jnp.where(row < limit, loss, 0.0)

    s = jnp.sum(loss)
    out_ref[...] = jnp.broadcast_to(s, out_ref.shape).astype(out_ref.dtype)


def _total_loss_classes_on_lanes(x, target, *, confidence, smoothing, tile_n):
    n, c = x.shape
    tgt = target.reshape(n, 1).astype(jnp.int32)
    esize = jnp.dtype(x.dtype).itemsize
    vmem_limit = _vmem_limit_bytes()

    per_row = (2 * c * esize
               + (c * 4 if esize < 4 else 0)
               + 4 * c * 4
               + 2 * 128 * 4)             # (tile_n, 1) target block lane-pads to 128
    if tile_n is None:
        budget = vmem_limit // 2
        tile_n = (budget // per_row) // 8 * 8
        tile_n = min(max(tile_n, 8), 512)
    else:
        tile_n = max(8, (tile_n // 8) * 8)
    if n <= tile_n:
        tile_n = n                        # single full block is always legal

    num_tiles = -(-n // tile_n)
    rem = n - (num_tiles - 1) * tile_n

    kernel = functools.partial(
        _ls_lane_kernel, confidence=float(confidence),
        smoothing=float(smoothing), num_classes=float(c),
        tile_n=tile_n, rem=rem)

    cost = pl.CostEstimate(
        flops=6 * n * c, transcendentals=n * c + n,
        bytes_accessed=n * c * esize + n * 4 + num_tiles * 128 * 4)

    partials = pl.pallas_call(
        kernel,
        out_shape=jax.ShapeDtypeStruct((num_tiles, 1, 128), jnp.float32),
        grid_spec=pltpu.PrefetchScalarGridSpec(
            num_scalar_prefetch=0,
            grid=(num_tiles,),
            in_specs=[pl.BlockSpec((tile_n, c), lambda i: (i, 0)),
                      pl.BlockSpec((tile_n, 1), lambda i: (i, 0))],
            out_specs=pl.BlockSpec((1, 1, 128), lambda i: (i, 0, 0)),
        ),
        compiler_params=pltpu.CompilerParams(
            dimension_semantics=("parallel",),
            vmem_limit_bytes=vmem_limit),
        cost_estimate=cost,
    )(x, tgt)

    total = jnp.sum(partials[:, 0, 0])
    return total, n


# -----------------------------------------------------------------------------
# Public wrapper (matches LabelSmoothing.forward semantics)
# -----------------------------------------------------------------------------
def label_smoothing_loss(x, target, *, smoothing=0.0, size_average="mean",
                         tile_hw=None, tile_n=None, x_buffer_count=2):
    """JAX/Pallas equivalent of LabelSmoothing.forward.

    x:      float array, shape (B, C, *spatial) (NCHW-style) or (N, C)
    target: int array,   shape (B, *spatial) (or flattened) or (N,)
    """
    confidence = 1.0 - smoothing

    if x.ndim == 2 and x.shape[1] >= 128:
        total, n_rows = _total_loss_classes_on_lanes(
            x, target, confidence=confidence, smoothing=smoothing, tile_n=tile_n)
    else:
        total, n_rows = _total_loss_classes_on_sublanes(
            x, target, confidence=confidence, smoothing=smoothing,
            tile_hw=tile_hw, x_buffer_count=x_buffer_count)

    if size_average == "mean":
        return total / jnp.float32(n_rows)
    return total                                       # PyTorch: anything else -> sum


if __name__ == "__main__":
    key = jax.random.PRNGKey(0)
    kx1, kt1, kx2, kt2, kx3, kt3 = jax.random.split(key, 6)

    def ref_loss(x, target, smoothing, size_average):
        if x.ndim > 2:
            b, c = x.shape[0], x.shape[1]
            xr = jnp.transpose(x.reshape(b, c, -1), (0, 2, 1)).reshape(-1, c)
        else:
            xr = x
        tr = target.reshape(-1)
        lp = jax.nn.log_softmax(xr.astype(jnp.float32), axis=1)
        nll = -jnp.take_along_axis(lp, tr[:, None], axis=1)[:, 0]
        sm = -jnp.mean(lp, axis=1)
        loss = (1.0 - smoothing) * nll + smoothing * sm
        return jnp.mean(loss) if size_average == "mean" else jnp.sum(loss)

    # 1) NCHW input: batch=2, classes=4, spatial=16x16 (primary case).
    B, C, H, W = 2, 4, 16, 16
    x1 = jax.random.normal(kx1, (B, C, H, W), dtype=jnp.float32)
    t1 = jax.random.randint(kt1, (B, H, W), 0, C, dtype=jnp.int32)
    out1 = jax.block_until_ready(label_smoothing_loss(x1, t1, smoothing=0.1))
    ref1 = ref_loss(x1, t1, 0.1, "mean")
    assert jnp.allclose(out1, ref1, rtol=1e-5, atol=1e-5), (out1, ref1)

    # 2) bsz=1, HW not a tile multiple -> partial last block (no jnp.pad),
    #    last-tile-only mask, dual-TC HW split, 'sum' reduction.
    x2 = jax.random.normal(kx2, (1, 4, 15, 20), dtype=jnp.float32)
    t2 = jax.random.randint(kt2, (1, 15, 20), 0, 4, dtype=jnp.int32)
    out2 = jax.block_until_ready(
        label_smoothing_loss(x2, t2, smoothing=0.1, size_average="sum",
                             tile_hw=128))
    ref2 = ref_loss(x2, t2, 0.1, "sum")
    assert jnp.allclose(out2, ref2, rtol=1e-4, atol=1e-3), (out2, ref2)

    # 3) 2-D (N, C>=128) path: lane-major classes, no host-side transpose,
    #    partial last row tile.
    N, C2 = 20, 128
    x3 = jax.random.normal(kx3, (N, C2), dtype=jnp.float32)
    t3 = jax.random.randint(kt3, (N,), 0, C2, dtype=jnp.int32)
    out3 = jax.block_until_ready(
        label_smoothing_loss(x3, t3, smoothing=0.2, tile_n=8))
    ref3 = ref_loss(x3, t3, 0.2, "mean")
    assert jnp.allclose(out3, ref3, rtol=1e-5, atol=1e-5), (out3, ref3)

    print("KERNEL_OK")
</pallas_src>

<mosaic_0001>
module attributes {stable_mosaic.version = 11 : i64} {
  func.func @_ls_sublane_kernel(%arg0: i32, %arg1: i32, %arg2: memref<1x4x256xf32, #tpu.memory_space<vmem>>, %arg3: memref<1x1x256xi32, #tpu.memory_space<vmem>>, %arg4: memref<1x1x128xf32, #tpu.memory_space<vmem>>, %arg5: memref<1x256xf32, #tpu.memory_space<vmem>>, %arg6: memref<4x256xi32, #tpu.memory_space<vmem>>) attributes {dimension_semantics = [#tpu.dimension_semantics<parallel>, #tpu.dimension_semantics<arbitrary>], iteration_bounds = array<i64: 2, 1>, scalar_prefetch = 0 : i64, scratch_operands = 2 : i64, tpu.core_type = #tpu.core_type<tc>, window_params = [{transform_indices = @transform_0, window_bounds = array<i64: 1, 4, 256>}, {transform_indices = @transform_1, window_bounds = array<i64: 1, 1, 256>}, {transform_indices = @transform_2, window_bounds = array<i64: 1, 1, 128>}]} {
    %c0_i32 = arith.constant 0 : i32
    %0 = arith.cmpi eq, %arg1, %c0_i32 : i32
    %1 = arith.extui %0 : i1 to i32
    %c0_i32_0 = arith.constant 0 : i32
    %2 = arith.cmpi ne, %1, %c0_i32_0 : i32
    scf.if %2 {
      %cst_18 = arith.constant 0.000000e+00 : f32
      %32 = vector.broadcast %cst_18 : f32 to vector<1x256xf32>
      %c0_19 = arith.constant 0 : index
      %c0_20 = arith.constant 0 : index
      %33 = vector.load %arg5[%c0_19, %c0_20] : memref<1x256xf32, #tpu.memory_space<vmem>>, vector<1x256xf32>
      tpu.vector_store %arg5[%c0_19, %c0_20], %32 {strides = array<i32>} : memref<1x256xf32, #tpu.memory_space<vmem>>, vector<1x256xf32>,
      %34 = tpu.iota {dimensions = array<i32: 0>} : vector<4x256xi32>
      %c0_21 = arith.constant 0 : index
      %c0_22 = arith.constant 0 : index
      %35 = vector.load %arg6[%c0_21, %c0_22] : memref<4x256xi32, #tpu.memory_space<vmem>>, vector<4x256xi32>
      tpu.vector_store %arg6[%c0_21, %c0_22], %34 {strides = array<i32>} : memref<4x256xi32, #tpu.memory_space<vmem>>, vector<4x256xi32>,
    } else {
    }
    %c0 = arith.constant 0 : index
    %c0_1 = arith.constant 0 : index
    %c0_2 = arith.constant 0 : index
    %3 = vector.load %arg2[%c0, %c0_1, %c0_2] : memref<1x4x256xf32, #tpu.memory_space<vmem>>, vector<1x4x256xf32>
    %4 = vector.shape_cast %3 : vector<1x4x256xf32> to vector<4x256xf32>
    %c0_3 = arith.constant 0 : index
    %c0_4 = arith.constant 0 : index
    %c0_5 = arith.constant 0 : index
    %5 = vector.load %arg3[%c0_3, %c0_4, %c0_5] : memref<1x1x256xi32, #tpu.memory_space<vmem>>, vector<1x1x256xi32>
    %6 = vector.shape_cast %5 : vector<1x1x256xi32> to vector<1x256xi32>
    %c0_6 = arith.constant 0 : index
    %c0_7 = arith.constant 0 : index
    %7 = vector.load %arg6[%c0_6, %c0_7] : memref<4x256xi32, #tpu.memory_space<vmem>>, vector<4x256xi32>
    %cst = arith.constant dense<0xFF800000> : vector<256xf32>
    %8 = vector.multi_reduction <maximumf>, %4, %cst [0] : vector<4x256xf32> to vector<256xf32>
    %9 = vector.shape_cast %8 : vector<256xf32> to vector<1x256xf32>
    %10 = vector.broadcast %9 : vector<1x256xf32> to vector<4x256xf32>
    %11 = arith.subf %4, %10 : vector<4x256xf32>
    %12 = math.exp %11 : vector<4x256xf32>
    %cst_8 = arith.constant dense<0.000000e+00> : vector<256xf32>
    %13 = vector.multi_reduction <add>, %12, %cst_8 [0] : vector<4x256xf32> to vector<256xf32>
    %14 = vector.shape_cast %13 : vector<256xf32> to vector<1x256xf32>
    %15 = math.log %14 : vector<1x256xf32>
    %16 = vector.broadcast %6 : vector<1x256xi32> to vector<4x256xi32>
    %17 = arith.cmpi eq, %7, %16 : vector<4x256xi32>
    %cst_9 = arith.constant 9.250000e-01 : f32
    %cst_10 = arith.constant 2.500000e-02 : f32
    %18 = vector.broadcast %cst_9 : f32 to vector<4x256xf32>
    %19 = vector.broadcast %cst_10 : f32 to vector<4x256xf32>
    %20 = arith.select %17, %18, %19 : vector<4x256xi1>, vector<4x256xf32>
    %21 = arith.mulf %20, %4 : vector<4x256xf32>
    %cst_11 = arith.constant dense<0.000000e+00> : vector<256xf32>
    %22 = vector.multi_reduction <add>, %21, %cst_11 [0] : vector<4x256xf32> to vector<256xf32>
    %23 = vector.shape_cast %22 : vector<256xf32> to vector<1x256xf32>
    %24 = arith.addf %9, %15 : vector<1x256xf32>
    %25 = arith.subf %24, %23 : vector<1x256xf32>
    %c0_12 = arith.constant 0 : index
    %c0_13 = arith.constant 0 : index
    %26 = vector.load %arg5[%c0_12, %c0_13] : memref<1x256xf32, #tpu.memory_space<vmem>>, vector<1x256xf32>
    %27 = arith.addf %26, %25 : vector<1x256xf32>
    %c0_14 = arith.constant 0 : index
    %c0_15 = arith.constant 0 : index
    %28 = vector.load %arg5[%c0_14, %c0_15] : memref<1x256xf32, #tpu.memory_space<vmem>>, vector<1x256xf32>
    tpu.vector_store %arg5[%c0_14, %c0_15], %27 {strides = array<i32>} : memref<1x256xf32, #tpu.memory_space<vmem>>, vector<1x256xf32>,
    %c0_i32_16 = arith.constant 0 : i32
    %29 = arith.cmpi eq, %arg1, %c0_i32_16 : i32
    %30 = arith.extui %29 : i1 to i32
    %c0_i32_17 = arith.constant 0 : i32
    %31 = arith.cmpi ne, %30, %c0_i32_17 : i32
    scf.if %31 {
      %c0_18 = arith.constant 0 : index
      %c0_19 = arith.constant 0 : index
      %32 = vector.load %arg5[%c0_18, %c0_19] : memref<1x256xf32, #tpu.memory_space<vmem>>, vector<1x256xf32>
      %33 = vector.extract_strided_slice %32 {offsets = [0, 0], sizes = [1, 128], strides = [1, 1]} : vector<1x256xf32> to vector<1x128xf32>
      %34 = vector.extract_strided_slice %32 {offsets = [0, 128], sizes = [1, 128], strides = [1, 1]} : vector<1x256xf32> to vector<1x128xf32>
      %35 = arith.addf %33, %34 : vector<1x128xf32>
      %36 = vector.shape_cast %35 : vector<1x128xf32> to vector<1x1x128xf32>
      %c0_20 = arith.constant 0 : index
      %c0_21 = arith.constant 0 : index
      %c0_22 = arith.constant 0 : index
      %37 = vector.load %arg4[%c0_20, %c0_21, %c0_22] : memref<1x1x128xf32, #tpu.memory_space<vmem>>, vector<1x1x128xf32>
      tpu.vector_store %arg4[%c0_20, %c0_21, %c0_22], %36 {strides = array<i32>} : memref<1x1x128xf32, #tpu.memory_space<vmem>>, vector<1x1x128xf32>,
    } else {
    }
    return
  }
  func.func @transform_0(%arg0: i32, %arg1: i32) -> (i32, i32, i32) {
    %c0_i32 = arith.constant 0 : i32
    %c0_i32_0 = arith.constant 0 : i32
    return %arg0, %c0_i32, %arg1 : i32, i32, i32
  }
  func.func @transform_1(%arg0: i32, %arg1: i32) -> (i32, i32, i32) {
    %c0_i32 = arith.constant 0 : i32
    %c0_i32_0 = arith.constant 0 : i32
    return %arg0, %c0_i32, %arg1 : i32, i32, i32
  }
  func.func @transform_2(%arg0: i32, %arg1: i32) -> (i32, i32, i32) {
    %c0_i32 = arith.constant 0 : i32
    %c0_i32_0 = arith.constant 0 : i32
    %c0_i32_1 = arith.constant 0 : i32
    return %arg0, %c0_i32, %c0_i32_0 : i32, i32, i32
  }
}

</mosaic_0001>

<llo_original>
// kernel: tpu_custom_call.1
$region0: #{tpu_custom_call.1}
  #allocation0 [shape = 'u32[]', space=smem, size = 0x4, offset = 0x4, fixed_abs, tag = 'smem constant byte address 0x4 - core index']
  #allocation1 [shape = 'u32[144,128]{1,0:T(1,128)}', space=vmem, size = 0x12000, scoped, tag = 'internal scratch']
  #allocation2 [shape = 'f32[1,256]{1,0:T(1,128)}', space=vmem, size = 0x400, scoped, tag = 'scratch operand']
  #allocation3 [shape = 's32[4,256]{1,0:T(4,128)}', space=vmem, size = 0x1000, scoped, tag = 'scratch operand']
  %s0 = inlined_call_operand.hbm [shape: f32[2,4,256], index: 0, kind: input, shape index: {}]
  %s1 = inlined_call_operand.hbm [shape: s32[2,1,256], index: 1, kind: input, shape index: {}]
  %s2 = inlined_call_operand.hbm [shape: f32[2,1,128], index: 2, kind: output, shape index: {}]
  %s3 = sld [smem:[#allocation0]]
  $region57: #{tpu_custom_call.1} parent=0
    _
  %s5 = ssub.s32 1, %s3
  %s6 = scalar_select 0, %s5, %s3
  $region1: #{tpu_custom_call.1} parent=0
    #allocation4 [shape = 'u8[8192]{0}', space=vmem, size = 0x2000, scoped, tag = 'input window, operand 0']
    #allocation5 [shape = 's32[2]{0}', space=sflag, size = 0x8, scoped, tag = 'scoped memory for tpu_custom_call.1']
    #allocation6 [shape = 's32[2]{0}', space=sflag, size = 0x8, scoped, tag = 'scoped memory for tpu_custom_call.1']
    #allocation7 [shape = 'u8[2048]{0}', space=vmem, size = 0x800, scoped, tag = 'input window, operand 1']
    #allocation8 [shape = 's32[2]{0}', space=sflag, size = 0x8, scoped, tag = 'scoped memory for tpu_custom_call.1']
    #allocation9 [shape = 'u8[1024]{0}', space=vmem, size = 0x400, scoped, tag = 'output window, operand 0']
    %7 = vsyncpa [#allocation5], 0
    %s8 = scalar_lea.sflag [#allocation5], 1
    %9 = vsyncpa %s8, 0
    %10 = vsyncpa [#allocation8], 0
    %s11 = scalar_lea.sflag [#allocation8], 1
    %12 = vsyncpa %s11, 0
    %13 = vsyncpa [#allocation6], 0
    %s14 = scalar_lea.sflag [#allocation6], 1
    %15 = vsyncpa %s14, 0
    loop: start=0, step=1, limit=4
    $region2: #{tpu_custom_call.1} parent=1 // loop_pre_header
      _
    $region3: #{tpu_custom_call.1} parent=1 // loop_header
      %s17 = sphi 0, %s21
      %p18 = scmp.ge.s32.totalorder %s17, 4
      %s24 = sphi 0, %s36
      %s25 = sphi 0, %s32
      %s26 = sphi 0, %s24
      %s27 = sphi 0, %s25
      %s28 = sphi 0, %s26
      %s29 = sphi 0, %s27
      %s41 = sphi 0, %s43
      %s44 = sphi 0, %s41
      %s45 = sphi 0, %s44
      %s61 = sphi 0, %s45
      %s69 = sphi 0, %s71
      %s72 = sphi 0, %s69
      %s73 = sphi 0, %s72
      %s89 = sphi 0, %s73
      %s95 = sphi 0, %s97
      %s98 = sphi 0, %s95
      %s99 = sphi 0, %s98
      %s115 = sphi 0, %s99
    $region4: #{tpu_custom_call.1} parent=1 // loop_header_branch
      %20 = sbr.rel (%p18) target = $region8
    $region5: #{tpu_custom_call.1} parent=1 // loop_body
      %s22 = ssub.s32 %s17, 1
      %s23 = ssub.s32 %s17, 2
      %s30 = sadd.s32 1, %s25
      %p31 = scmp.ge.s32.totalorder %s30, 1
      %s32 = scalar_select %p31, 0, %s30
      %s33 = sadd.s32 1, %s24
      %s34 = scalar_select %p31, %s33, %s24
      %p35 = scmp.ge.s32.totalorder %s34, 2
      %s36 = scalar_select %p35, 0, %s34
      %s37 = ssub.s32 %s24, %s36
      %s38 = ssub.s32 %s25, %s32
      %s39 = sor.u32 %s37, %s38
      %p40 = scmp.eq.s32.totalorder %s39, 0
      %s42 = sadd.s32 %s41, 1
      %s43 = scalar_select %p40, %s41, %s42
      %p46 = pneg %p40
      %p47 = scmp.eq.s32.totalorder %s17, 1
      %p48 = por %p46, %p47
      %p49 = scmp.ne.s32.totalorder %s41, %s44
      %p50 = scmp.eq.s32.totalorder %s17, 0
      %p51 = por %p49, %p50
      %p52 = scmp.ne.s32.totalorder %s41, %s44
      %p53 = scmp.eq.s32.totalorder %s22, 1
      %p54 = por %p52, %p53
      %p55 = scmp.ne.s32.totalorder %s44, %s45
      %p56 = scmp.eq.s32.totalorder %s22, 0
      %p57 = por %p55, %p56
      %p58 = scmp.ne.s32.totalorder %s44, %s45
      %p59 = scmp.eq.s32.totalorder %s23, 1
      %p60 = por %p58, %p59
      %p62 = scmp.ne.s32.totalorder %s45, %s61
      %p63 = scmp.eq.s32.totalorder %s23, 0
      %p64 = por %p62, %p63
      %s65 = ssub.s32 %s24, %s36
      %s66 = ssub.s32 %s25, %s32
      %s67 = sor.u32 %s65, %s66
      %p68 = scmp.eq.s32.totalorder %s67, 0
      %s70 = sadd.s32 %s69, 1
      %s71 = scalar_select %p68, %s69, %s70
      %p74 = pneg %p68
      %p75 = scmp.eq.s32.totalorder %s17, 1
      %p76 = por %p74, %p75
      %p77 = scmp.ne.s32.totalorder %s69, %s72
      %p78 = scmp.eq.s32.totalorder %s17, 0
      %p79 = por %p77, %p78
      %p80 = scmp.ne.s32.totalorder %s69, %s72
      %p81 = scmp.eq.s32.totalorder %s22, 1
      %p82 = por %p80, %p81
      %p83 = scmp.ne.s32.totalorder %s72, %s73
      %p84 = scmp.eq.s32.totalorder %s22, 0
      %p85 = por %p83, %p84
      %p86 = scmp.ne.s32.totalorder %s72, %s73
      %p87 = scmp.eq.s32.totalorder %s23, 1
      %p88 = por %p86, %p87
      %p90 = scmp.ne.s32.totalorder %s73, %s89
      %p91 = scmp.eq.s32.totalorder %s23, 0
      %p92 = por %p90, %p91
      %s93 = ssub.s32 %s24, %s36
      %p94 = scmp.eq.s32.totalorder %s93, 0
      %s96 = sadd.s32 %s95, 1
      %s97 = scalar_select %p94, %s95, %s96
      %p100 = pneg %p94
      %p101 = scmp.eq.s32.totalorder %s17, 1
      %p102 = por %p100, %p101
      %p103 = scmp.ne.s32.totalorder %s95, %s98
      %p104 = scmp.eq.s32.totalorder %s17, 0
      %p105 = por %p103, %p104
      %p106 = scmp.ne.s32.totalorder %s95, %s98
      %p107 = scmp.eq.s32.totalorder %s22, 1
      %p108 = por %p106, %p107
      %p109 = scmp.ne.s32.totalorder %s98, %s99
      %p110 = scmp.eq.s32.totalorder %s22, 0
      %p111 = por %p109, %p110
      %p112 = scmp.ne.s32.totalorder %s98, %s99
      %p113 = scmp.eq.s32.totalorder %s23, 1
      %p114 = por %p112, %p113
      %p116 = scmp.ne.s32.totalorder %s99, %s115
      %p117 = scmp.eq.s32.totalorder %s23, 0
      %p118 = por %p116, %p117
      %p119 = scmp.le.s32.totalorder 1, %s17
      %p120 = scmp.lt.s32.totalorder %s17, 3
      %p121 = pnand %p119, %p120
      %p122 = pneg %p121
      // Predicated region
      $region9: #{tpu_custom_call.1} parent=5 // pred_check
        _
      $region10: #{tpu_custom_call.1} parent=5 // pred_check_branch
        %124 = sbr.rel (%p121) target = $region12
      $region11: #{tpu_custom_call.1} parent=5 // pred_region
        %s125 = ssub.s32 %s17, 1
      $region12: #{tpu_custom_call.1} parent=5 // pred_fallthru
        _
      %p126 = scmp.lt.s32.totalorder %s17, 2
      // Predicated region
      $region13: #{tpu_custom_call.1} parent=5 // pred_check
        %p127 = pneg %p126
      $region14: #{tpu_custom_call.1} parent=5 // pred_check_branch
        %129 = sbr.rel (%p127) target = $region16
      $region15: #{tpu_custom_call.1} parent=5 // pred_region
        // Predicated region
        $region17: #{tpu_custom_call.1} parent=15 // pred_check
          %p130 = pneg %p51
        $region18: #{tpu_custom_call.1} parent=15 // pred_check_branch
          %132 = sbr.rel (%p130) target = $region20
        $region19: #{tpu_custom_call.1} parent=15 // pred_region
          %s133 = sand.u32 %s41, 1
          %s134 = scalar_lea.sflag [#allocation5], %s133
          %s135 = sand.u32 %s41, 1
          %s136 = smul.addr %s135, 8
          %s137 = scalar_lea.vmem [#allocation4], %s136
          %s138 = smul.u32 2, %s25
          %s140 = ssub.s32 128, 128
          %141 = vsyncadd %s134, %s140
          %s142 = smul.addr %s24, 2
          %s143 = sadd.s32 %s138, %s142
          %s144 = smul.addr %s143, 64
          %s145 = scalar_lea.hbm %s0, %s144
          %s147 = sshll.u32 %s137, 4
          %s148 = int_to_ptr.vmem [resolvable:$true] %s147
          %150 = dma.hbm_to_vmem [thread:$0]  %s145, 128, %s148, %s134
        $region20: #{tpu_custom_call.1} parent=15 // pred_fallthru
          _
        // Predicated region
        $region21: #{tpu_custom_call.1} parent=15 // pred_check
          %p151 = pneg %p79
        $region22: #{tpu_custom_call.1} parent=15 // pred_check_branch
          %153 = sbr.rel (%p151) target = $region24
        $region23: #{tpu_custom_call.1} parent=15 // pred_region
          %s154 = sand.u32 %s69, 1
          %s155 = scalar_lea.sflag [#allocation8], %s154
          %s156 = sand.u32 %s69, 1
          %s157 = smul.addr %s156, 2
          %s158 = scalar_lea.vmem [#allocation7], %s157
          %s159 = smul.u32 2, %s25
          %s161 = ssub.s32 32, 32
          %162 = vsyncadd %s155, %s161
          %s163 = smul.addr %s24, 2
          %s164 = sadd.s32 %s159, %s163
          %s165 = smul.addr %s164, 16
          %s166 = scalar_lea.hbm %s1, %s165
          %s168 = sshll.u32 %s158, 4
          %s169 = int_to_ptr.vmem [resolvable:$true] %s168
          %171 = dma.hbm_to_vmem [thread:$0]  %s166, 32, %s169, %s155
        $region24: #{tpu_custom_call.1} parent=15 // pred_fallthru
          _
      $region16: #{tpu_custom_call.1} parent=5 // pred_fallthru
        _
      %p172 = scmp.le.s32.totalorder 1, %s17
      %p173 = scmp.lt.s32.totalorder %s17, 3
      %p174 = pnand %p172, %p173
      %p175 = pneg %p174
      // Predicated region
      $region25: #{tpu_custom_call.1} parent=5 // pred_check
        _
      $region26: #{tpu_custom_call.1} parent=5 // pred_check_branch
        %177 = sbr.rel (%p174) target = $region28
      $region27: #{tpu_custom_call.1} parent=5 // pred_region
        %s178 = ssub.s32 %s17, 1
        %s179 = sand.u32 %s44, 1
        %s180 = scalar_lea.sflag [#allocation5], %s179
        %s181 = sand.u32 %s44, 1
        %s182 = smul.addr %s181, 8
        %s183 = scalar_lea.vmem [#allocation4], %s182
        // Predicated region
        $region29: #{tpu_custom_call.1} parent=27 // pred_check
          %p184 = pneg %p57
        $region30: #{tpu_custom_call.1} parent=27 // pred_check_branch
          %186 = sbr.rel (%p184) target = $region32
        $region31: #{tpu_custom_call.1} parent=27 // pred_region
          %187 = dma.done %s180, 128
        $region32: #{tpu_custom_call.1} parent=27 // pred_fallthru
          _
        %s188 = sand.u32 %s72, 1
        %s189 = scalar_lea.sflag [#allocation8], %s188
        %s190 = sand.u32 %s72, 1
        %s191 = smul.addr %s190, 2
        %s192 = scalar_lea.vmem [#allocation7], %s191
        // Predicated region
        $region33: #{tpu_custom_call.1} parent=27 // pred_check
          %p193 = pneg %p85
        $region34: #{tpu_custom_call.1} parent=27 // pred_check_branch
          %195 = sbr.rel (%p193) target = $region36
        $region35: #{tpu_custom_call.1} parent=27 // pred_region
          %196 = dma.done %s189, 32
        $region36: #{tpu_custom_call.1} parent=27 // pred_fallthru
          _
        %s197 = sand.u32 %s44, 1
        %s198 = scalar_lea.sflag [#allocation5], %s197
        %s199 = sand.u32 %s44, 1
        %s200 = smul.addr %s199, 8
        %s201 = scalar_lea.vmem [#allocation4], %s200
        %p202 = pneg %p57
        %p203 = pneg %p54
        %s204 = sand.u32 %s72, 1
        %s205 = scalar_lea.sflag [#allocation8], %s204
        %s206 = sand.u32 %s72, 1
        %s207 = smul.addr %s206, 2
        %s208 = scalar_lea.vmem [#allocation7], %s207
        %p209 = pneg %p85
        %p210 = pneg %p82
        %p211 = pneg %p111
        %p212 = pneg %p108
        %s213 = sand.u32 %s98, 1
        %s214 = scalar_lea.sflag [#allocation6], %s213
        %s215 = sand.u32 %s98, 1
        %s216 = scalar_lea.vmem [#allocation9], %s215
        %s217 = smul.u32 2, %s27
        %s218 = smul.u32 2, %s27
        %p219 = scmp.eq.s32.totalorder %s27, 0
        // Predicated region
        $region37: #{tpu_custom_call.1} parent=27 // pred_check
          %p220 = pneg %p219
        $region38: #{tpu_custom_call.1} parent=27 // pred_check_branch
          %222 = sbr.rel (%p220) target = $region40
        $region39: #{tpu_custom_call.1} parent=27 // pred_region
          %v223 = vlaneseq
          %vm224 = vcmp.ge.s32.totalorder %v223, 0
          %vm225 = vcmp.lt.s32.totalorder %v223, 256
          %vm226 = vmand %vm224, %vm225
          %227 = vst.msk [vmem:[#allocation2] sm:$0x3] %vm226, 0.0
          %v228 = vlaneseq
          %v229 = vshrl.u32 %v228, 7
          %v231 = vunpack.c.l.s4 839922192
          %v232 = vunpack.c.0.s8 %v231
          %v233 = vlaneseq
          %v234 = vshrl.u32 %v233, 7
          %v235 = vsub.s32 %v232, %v234
          %v236 = vrot.slane %v229, %v235
          %237 = vst [vmem:[#allocation3] sm:$0xff] %v236
        $region40: #{tpu_custom_call.1} parent=27 // pred_fallthru
          _
        %v238 = vld [vmem:[%s183] sm:$0xff]
        %v239 = vld [vmem:[%s192] sm:$0x3]
        %v240 = vld [vmem:[#allocation3] sm:$0xff]
        %v242 = vcombine.high %v238, %v238
        %vm244 = vcmask 1043456
        %v245 = vsel %vm244, %v238, -inf
        %v246 = vrot.slane %v245, 4
        %v247 = vmax.f32 %v245, %v246
        %v248 = vrot.slane %v247, 2
        %v249 = vmax.f32 %v247, %v248
        %v250 = vrot.slane %v249, 1
        %v251 = vmax.f32 %v249, %v250
        %v252 = vsel %vm244, %v242, -inf
        %v253 = vrot.slane %v252, 4
        %v254 = vmax.f32 %v252, %v253
        %v255 = vrot.slane %v254, 2
        %v256 = vmax.f32 %v254, %v255
        %v257 = vrot.slane %v256, 1
        %v258 = vmax.f32 %v256, %v257
        %v261 = vcombine.low %v251, %v258
        %v263 = vsub.f32 %v238, %v261
        %v264 = vmul.f32 %v263, 1.442695
        %v265 = vpow.pop %v264
        %v267 = vcombine.high %v265, %v265
        %v269 = vsel %vm244, %v265, 0.0
        %v270 = vrot.slane %v269, 4
        %v271 = vadd.f32 %v269, %v270
        %v272 = vrot.slane %v271, 2
        %v273 = vadd.f32 %v271, %v272
        %v274 = vrot.slane %v273, 1
        %v275 = vadd.f32 %v273, %v274
        %v276 = vsel %vm244, %v267, 0.0
        %v277 = vrot.slane %v276, 4
        %v278 = vadd.f32 %v276, %v277
        %v279 = vrot.slane %v278, 2
        %v280 = vadd.f32 %v278, %v279
        %v281 = vrot.slane %v280, 1
        %v282 = vadd.f32 %v280, %v281
        %v283 = vlog2.pop %v275
        %v284 = vmul.f32 %v283, 0.6931472
        %v285 = vlog2.pop %v282
        %v286 = vmul.f32 %v285, 0.6931472
        %v287 = vlaneseq
        %v288 = vshrl.u32 %v287, 7
        %v289 = vsub.s32 0, %v288
        %v290 = vrot.slane %v239, %v289
        %v291 = vlaneseq
        %v292 = vshrl.u32 %v291, 7
        %v293 = vsub.s32 1, %v292
        %v294 = vrot.slane %v239, %v293
        %v295 = vcombine.low %v290, %v294
        %vm296 = vcmp.eq.s32.totalorder %v240, %v295
        %v297 = vsel %vm296, 0.925, 0.025
        %v298 = vmul.f32 %v297, %v238
        %v300 = vcombine.high %v298, %v298
        %v302 = vsel %vm244, %v298, 0.0
        %v303 = vrot.slane %v302, 4
        %v304 = vadd.f32 %v302, %v303
        %v305 = vrot.slane %v304, 2
        %v306 = vadd.f32 %v304, %v305
        %v307 = vrot.slane %v306, 1
        %v308 = vadd.f32 %v306, %v307
        %v309 = vsel %vm244, %v300, 0.0
        %v310 = vrot.slane %v309, 4
        %v311 = vadd.f32 %v309, %v310
        %v312 = vrot.slane %v311, 2
        %v313 = vadd.f32 %v311, %v312
        %v314 = vrot.slane %v313, 1
        %v315 = vadd.f32 %v313, %v314
        %v316 = vadd.f32 %v251, %v284
        %v317 = vadd.f32 %v258, %v286
        %v318 = vsub.f32 %v316, %v308
        %v319 = vsub.f32 %v317, %v315
        %v320 = vld [vmem:[#allocation2] sm:$0x3]
        %v323 = vcombine.low %v318, %v319
        %v325 = vunpack.c.l.s4 1966171168
        %v326 = vunpack.c.0.s8 %v325
        %v327 = vlaneseq
        %v328 = vshrl.u32 %v327, 7
        %v329 = vsub.s32 %v326, %v328
        %v330 = vrot.slane %v323, %v329
        %v332 = vunpack.c.l.s4 1966171168
        %v333 = vunpack.c.0.s8 %v332
        %v334 = vlaneseq
        %v335 = vshrl.u32 %v334, 7
        %v336 = vsub.s32 %v333, %v335
        %v337 = vrot.slane %v330, %v336
        %v339 = vadd.f32 %v320, %v337
        %v340 = vlaneseq
        %vm341 = vcmp.ge.s32.totalorder %v340, 0
        %vm342 = vcmp.lt.s32.totalorder %v340, 256
        %vm343 = vmand %vm341, %vm342
        %344 = vst.msk [vmem:[#allocation2] sm:$0x3] %vm343, %v339
        // Predicated region
        $region41: #{tpu_custom_call.1} parent=27 // pred_check
          %p345 = pneg %p219
        $region42: #{tpu_custom_call.1} parent=27 // pred_check_branch
          %347 = sbr.rel (%p345) target = $region44
        $region43: #{tpu_custom_call.1} parent=27 // pred_region
          %v348 = vld [vmem:[#allocation2] sm:$0x3]
          %v350 = vrot.slane %v348, 1
          %v352 = vadd.f32 %v348, %v350
          %353 = vst [vmem:[%s216] sm:$0x1] %v352
        $region44: #{tpu_custom_call.1} parent=27 // pred_fallthru
          _
        %s354 = sand.u32 %s98, 1
        %s355 = scalar_lea.sflag [#allocation6], %s354
        %s356 = sand.u32 %s98, 1
        %s357 = scalar_lea.vmem [#allocation9], %s356
        // Predicated region
        $region45: #{tpu_custom_call.1} parent=27 // pred_check
          %p358 = pneg %p108
        $region46: #{tpu_custom_call.1} parent=27 // pred_check_branch
          %360 = sbr.rel (%p358) target = $region48
        $region47: #{tpu_custom_call.1} parent=27 // pred_region
          %s362 = ssub.s32 16, 16
          %363 = vsyncadd %s355, %s362
          %s364 = smul.addr %s26, 16
          %s365 = scalar_lea.hbm %s2, %s364
          %s367 = sshll.u32 %s357, 4
          %s368 = int_to_ptr.vmem [resolvable:$true] %s367
          %370 = dma.vmem_to_hbm [thread:$0]  %s368, 16, %s365, %s355
        $region48: #{tpu_custom_call.1} parent=27 // pred_fallthru
          _
      $region28: #{tpu_custom_call.1} parent=5 // pred_fallthru
        _
      %p371 = scmp.le.s32.totalorder 2, %s17
      // Predicated region
      $region49: #{tpu_custom_call.1} parent=5 // pred_check
        %p372 = pneg %p371
      $region50: #{tpu_custom_call.1} parent=5 // pred_check_branch
        %374 = sbr.rel (%p372) target = $region52
      $region51: #{tpu_custom_call.1} parent=5 // pred_region
        %s375 = ssub.s32 %s17, 2
        // Predicated region
        $region53: #{tpu_custom_call.1} parent=51 // pred_check
          %p376 = pneg %p114
        $region54: #{tpu_custom_call.1} parent=51 // pred_check_branch
          %378 = sbr.rel (%p376) target = $region56
        $region55: #{tpu_custom_call.1} parent=51 // pred_region
          %s379 = sand.u32 %s99, 1
          %s380 = scalar_lea.sflag [#allocation6], %s379
          %s381 = sand.u32 %s99, 1
          %s382 = scalar_lea.vmem [#allocation9], %s381
          %383 = dma.done %s380, 16
        $region56: #{tpu_custom_call.1} parent=51 // pred_fallthru
          _
      $region52: #{tpu_custom_call.1} parent=5 // pred_fallthru
        _
    $region6: #{tpu_custom_call.1} parent=1 // loop_footer
      %s21 = sadd.s32 1, %s17
    $region7: #{tpu_custom_call.1} parent=1 // loop_footer_branch
      %16 = sbr.rel target = $region3
    $region8: #{tpu_custom_call.1} parent=1 // loop_exit
      _
    %384 = vsyncpa [#allocation5], 1
    %s385 = scalar_lea.sflag [#allocation5], 1
    %386 = vsyncpa %s385, 1
    %387 = vsyncpa [#allocation8], 1
    %s388 = scalar_lea.sflag [#allocation8], 1
    %389 = vsyncpa %s388, 1
    %390 = vsyncpa [#allocation6], 1
    %s391 = scalar_lea.sflag [#allocation6], 1
    %392 = vsyncpa %s391, 1

</llo_original>
